<compile_context>
chip_gen: v5e
topology: v5e:2x2
jax: 0.10.0
libtpu: 0.0.40
codegen_flags: <defaults>
</compile_context>

<pallas_src>
import jax
import jax.numpy as jnp
from jax.experimental import pallas as pl
from jax.experimental.pallas import tpu as pltpu

_LANE = 1024            # 8 sublanes * 128 lanes -> one full f32 vreg per row-block
_MAX_TILE_ROWS = 512    # 512 x 1024 f32 = 2 MiB per tile (x4 buffers = 8 MiB VMEM)


def _sine_kernel(x_ref, o_ref):
    # out = sin(30 * x); compute in f32, cast back to the output dtype.
    x = x_ref[...].astype(jnp.float32)
    o_ref[...] = jnp.sin(30.0 * x).astype(o_ref.dtype)


def sine(x: jax.Array) -> jax.Array:
    """Equivalent of Sine()(x) == torch.sin(30.0 * x), any shape/dtype."""
    orig_shape = x.shape
    dtype = x.dtype

    flat = x.reshape(-1)
    n = flat.shape[0]

    # Rows of the lane-dense slab (each row is one 1024-wide vreg-aligned chunk).
    rows = -(-n // _LANE)                       # ceil div
    rows8 = ((rows + 7) // 8) * 8               # sublane (8) alignment
    tile_r = min(_MAX_TILE_ROWS, rows8)         # large tile, but not > data
    padded_rows = ((rows8 + tile_r - 1) // tile_r) * tile_r
    padded_n = padded_rows * _LANE

    if padded_n != n:
        flat = jnp.pad(flat, (0, padded_n - n))
    slab = flat.reshape(padded_rows, _LANE)

    grid = (padded_rows // tile_r,)

    out_slab = pl.pallas_call(
        _sine_kernel,
        out_shape=jax.ShapeDtypeStruct((padded_rows, _LANE), dtype),
        grid=grid,
        in_specs=[pl.BlockSpec((tile_r, _LANE), lambda i: (i, 0))],
        out_specs=pl.BlockSpec((tile_r, _LANE), lambda i: (i, 0)),
        compiler_params=pltpu.CompilerParams(
            dimension_semantics=("parallel",),      # lets v7x split tiles across 2 TCs
            vmem_limit_bytes=32 * 1024 * 1024,      # explicit, safe on v5e/v6e/v7x
        ),
    )(slab)

    return out_slab.reshape(-1)[:n].reshape(orig_shape)


if __name__ == "__main__":
    key = jax.random.PRNGKey(0)
    # Small shape consistent with a generic activation input.
    x = jax.random.normal(key, (2, 4, 16, 16), dtype=jnp.float32)

    out = sine(x)
    out = jax.block_until_ready(out)

    # correctness check vs pure-JAX reference
    ref = jnp.sin(30.0 * x)
    assert out.shape == x.shape and out.dtype == x.dtype
    assert jnp.allclose(out, ref, rtol=1e-6, atol=1e-6)

    print("KERNEL_OK")
</pallas_src>

<mosaic_0001>
module attributes {stable_mosaic.version = 11 : i64} {
  func.func @_sine_kernel(%arg0: i32, %arg1: memref<8x1024xf32, #tpu.memory_space<vmem>>, %arg2: memref<8x1024xf32, #tpu.memory_space<vmem>>) attributes {dimension_semantics = [#tpu.dimension_semantics<parallel>], iteration_bounds = array<i64: 1>, scalar_prefetch = 0 : i64, scratch_operands = 0 : i64, tpu.core_type = #tpu.core_type<tc>, window_params = [{transform_indices = @transform_0, window_bounds = array<i64: 8, 1024>}, {transform_indices = @transform_1, window_bounds = array<i64: 8, 1024>}]} {
    %c0 = arith.constant 0 : index
    %c0_0 = arith.constant 0 : index
    %0 = vector.load %arg1[%c0, %c0_0] : memref<8x1024xf32, #tpu.memory_space<vmem>>, vector<8x1024xf32>
    %cst = arith.constant 3.000000e+01 : f32
    %1 = vector.broadcast %cst : f32 to vector<8x1024xf32>
    %2 = arith.mulf %1, %0 : vector<8x1024xf32>
    %3 = math.sin %2 : vector<8x1024xf32>
    %c0_1 = arith.constant 0 : index
    %c0_2 = arith.constant 0 : index
    %4 = vector.load %arg2[%c0_1, %c0_2] : memref<8x1024xf32, #tpu.memory_space<vmem>>, vector<8x1024xf32>
    tpu.vector_store %arg2[%c0_1, %c0_2], %3 {strides = array<i32>} : memref<8x1024xf32, #tpu.memory_space<vmem>>, vector<8x1024xf32>,
    return
  }
  func.func @transform_0(%arg0: i32) -> (i32, i32) {
    %c0_i32 = arith.constant 0 : i32
    %c0_i32_0 = arith.constant 0 : i32
    return %arg0, %c0_i32 : i32, i32
  }
  func.func @transform_1(%arg0: i32) -> (i32, i32) {
    %c0_i32 = arith.constant 0 : i32
    %c0_i32_0 = arith.constant 0 : i32
    return %arg0, %c0_i32 : i32, i32
  }
}

</mosaic_0001>

<llo_original>
// kernel: tpu_custom_call.1
$region0: #{tpu_custom_call.1}
  #allocation0 [shape = 'u32[]', space=smem, size = 0x4, offset = 0x4, fixed_abs, tag = 'smem constant byte address 0x4 - core index']
  #allocation1 [shape = 'u32[72,128]{1,0:T(1,128)}', space=vmem, size = 0x9000, scoped, tag = 'internal scratch']
  %s0 = inlined_call_operand.hbm [shape: f32[8,1024], index: 0, kind: input, shape index: {}]
  %s1 = inlined_call_operand.hbm [shape: f32[8,1024], index: 1, kind: output, shape index: {}]
  %s2 = sld [smem:[#allocation0]]
  $region18: #{tpu_custom_call.1} parent=0
    _
  %s4 = ssub.s32 1, %s2
  %s5 = scalar_select 0, %s4, %s2
  $region1: #{tpu_custom_call.1} parent=0
    #allocation2 [shape = 'u8[32768]{0}', space=vmem, size = 0x8000, scoped, tag = 'input window, operand 0, single buffered']
    #allocation3 [shape = 's32[1]{0}', space=sflag, size = 0x4, scoped, tag = 'scoped memory for tpu_custom_call.1']
    #allocation4 [shape = 's32[1]{0}', space=sflag, size = 0x4, scoped, tag = 'scoped memory for tpu_custom_call.1']
    #allocation5 [shape = 'u8[32768]{0}', space=vmem, size = 0x8000, scoped, tag = 'output window, operand 0, single buffered']
    %6 = vsyncpa [#allocation3], 0
    %7 = vsyncpa [#allocation4], 0
    // Predicated region
    $region2: #{tpu_custom_call.1} parent=1 // pred_check
      _
    $region3: #{tpu_custom_call.1} parent=1 // pred_check_branch
      %9 = sbr.rel (0) target = $region5
    $region4: #{tpu_custom_call.1} parent=1 // pred_region
      %11 = vsyncadd [#allocation3], 0
      %s13 = sshll.u32 %s0, 4
      %s14 = int_to_ptr.hbm [resolvable:$true] %s13
      %s15 = sshll.u32 [#allocation2], 4
      %s16 = int_to_ptr.vmem [resolvable:$true] %s15
      %18 = dma.hbm_to_vmem [thread:$0]  %s14, 1024, %s16, [#allocation3]
    $region5: #{tpu_custom_call.1} parent=1 // pred_fallthru
      _
    // Predicated region
    $region6: #{tpu_custom_call.1} parent=1 // pred_check
      _
    $region7: #{tpu_custom_call.1} parent=1 // pred_check_branch
      %20 = sbr.rel (0) target = $region9
    $region8: #{tpu_custom_call.1} parent=1 // pred_region
      %22 = dma.done [#allocation3], 1024
    $region9: #{tpu_custom_call.1} parent=1 // pred_fallthru
      _
    %v23 = vld [vmem:[#allocation2] sm:$0xff]
    %v24 = vld [vmem:[#allocation2 + $0x8] sm:$0xff]
    %v25 = vld [vmem:[#allocation2 + $0x10] sm:$0xff]
    %v26 = vld [vmem:[#allocation2 + $0x18] sm:$0xff]
    %v27 = vld [vmem:[#allocation2 + $0x20] sm:$0xff]
    %v28 = vld [vmem:[#allocation2 + $0x28] sm:$0xff]
    %v29 = vld [vmem:[#allocation2 + $0x30] sm:$0xff]
    %v30 = vld [vmem:[#allocation2 + $0x38] sm:$0xff]
    %v31 = vmul.f32 %v23, 30.0
    %v32 = vmul.f32 %v24, 30.0
    %v33 = vmul.f32 %v25, 30.0
    %v34 = vmul.f32 %v26, 30.0
    %v35 = vmul.f32 %v27, 30.0
    %v36 = vmul.f32 %v28, 30.0
    %v37 = vmul.f32 %v29, 30.0
    %v38 = vmul.f32 %v30, 30.0
    %v39 = vand.u32 2147483647, %v31
    %vm40 = vcmp.le.f32.partialorder %v39, 0.7853982
    %vm41 = vcmp.lt.s32.totalorder %v31, 0
    %v42 = vand.u32 %v31, 2139095040
    %v43 = vshrl.u32 %v42, 23
    %v44 = vsub.s32 %v43, 127
    %v45 = vand.u32 2147483647, %v31
    %v46 = vand.u32 %v45, 8388607
    %v47 = vor.u32 %v46, 8388608
    %v48 = vsub.s32 0, %v47
    %v49 = vadd.s32 %v44, 1
    %vm50 = vcmp.gt.s32.totalorder %v49, 0
    %v51 = vsel %vm50, %v49, 0
    %v52 = vshrl.u32 %v51, 5
    %v53 = vand.u32 %v51, 31
    %v54 = vsub.s32 32, %v53
    %v55 = vshrl.u32 683565275, %v54
    %v56 = vshll.u32 683565275, %v53
    %v57 = vshrl.u32 2475754826, %v54
    %v58 = vor.u32 %v56, %v57
    %v59 = vshll.u32 2475754826, %v53
    %v60 = vshrl.u32 2131351028, %v54
    %v61 = vor.u32 %v59, %v60
    %v62 = vshll.u32 2131351028, %v53
    %v63 = vshrl.u32 2102212464, %v54
    %v64 = vor.u32 %v62, %v63
    %v65 = vshll.u32 2102212464, %v53
    %v66 = vshrl.u32 920167782, %v54
    %v67 = vor.u32 %v65, %v66
    %v68 = vshll.u32 920167782, %v53
    %v69 = vshrl.u32 1326507024, %v54
    %v70 = vor.u32 %v68, %v69
    %vm71 = vcmp.lt.s32.totalorder %v52, 1
    %vm72 = vcmp.lt.s32.totalorder %v52, 2
    %vm73 = vcmp.lt.s32.totalorder %v52, 3
    %vm74 = vcmp.lt.s32.totalorder %v52, 4
    %v75 = vsel %vm71, %v55, %v58
    %v76 = vsel %vm74, %v64, 2102212464
    %v77 = vsel %vm73, %v61, %v76
    %v78 = vsel %vm72, %v75, %v77
    %v79 = vsel %vm71, %v58, %v61
    %v80 = vsel %vm74, %v67, 920167782
    %v81 = vsel %vm73, %v64, %v80
    %v82 = vsel %vm72, %v79, %v81
    %v83 = vsel %vm71, %v61, %v64
    %v84 = vsel %vm74, %v70, 1326507024
    %v85 = vsel %vm73, %v67, %v84
    %v86 = vsel %vm72, %v83, %v85
    %v87 = vshll.u32 %v47, 8
    %v88 = vand.u32 %v87, 65535
    %v89 = vshrl.u32 %v87, 16
    %v90 = vand.u32 %v86, 65535
    %v91 = vshrl.u32 %v86, 16
    %v92 = vmul.u32 %v88, %v90
    %v93 = vmul.u32 %v88, %v91
    %v94 = vmul.u32 %v89, %v90
    %v95 = vmul.u32 %v89, %v91
    %v96 = vshll.u32 %v93, 16
    %v97 = vshrl.u32 %v93, 16
    %v98 = vshll.u32 %v94, 16
    %v99 = vshrl.u32 %v94, 16
    %vm100 = vc.u32 %v92, %v96
    %v101 = vsel %vm100, 1, 0
    %v102 = vadd.s32 %v92, %v96
    %v103 = vadd.s32 %v95, %v101
    %vm104 = vc.u32 %v102, %v98
    %v105 = vsel %vm104, 1, 0
    %v106 = vadd.s32 %v102, %v98
    %v107 = vadd.s32 %v103, %v105
    %v108 = vadd.s32 %v107, %v97
    %v109 = vadd.s32 %v108, %v99
    %v110 = vand.u32 %v87, 65535
    %v111 = vshrl.u32 %v87, 16
    %v112 = vand.u32 %v82, 65535
    %v113 = vshrl.u32 %v82, 16
    %v114 = vmul.u32 %v110, %v112
    %v115 = vmul.u32 %v110, %v113
    %v116 = vmul.u32 %v111, %v112
    %v117 = vmul.u32 %v111, %v113
    %v118 = vshll.u32 %v115, 16
    %v119 = vshrl.u32 %v115, 16
    %v120 = vshll.u32 %v116, 16
    %v121 = vshrl.u32 %v116, 16
    %vm122 = vc.u32 %v114, %v118
    %v123 = vsel %vm122, 1, 0
    %v124 = vadd.s32 %v114, %v118
    %v125 = vadd.s32 %v117, %v123
    %vm126 = vc.u32 %v124, %v120
    %v127 = vsel %vm126, 1, 0
    %v128 = vadd.s32 %v124, %v120
    %v129 = vadd.s32 %v125, %v127
    %v130 = vadd.s32 %v129, %v119
    %v131 = vadd.s32 %v130, %v121
    %v132 = vmul.u32 %v87, %v78
    %v133 = vadd.s32 %v109, %v128
    %vm134 = vc.u32 %v109, %v128
    %v135 = vadd.s32 %v131, 1
    %v136 = vsel %vm134, %v135, %v131
    %v137 = vadd.s32 %v132, %v136
    %v138 = vadd.s32 %v137, 536870912
    %v139 = vshrl.u32 %v138, 30
    %v140 = vshll.u32 %v139, 30
    %v141 = vsub.s32 %v137, %v140
    %vm142 = vcmp.lt.s32.totalorder %v141, 0
    %v143 = vsub.s32 0, %v141
    %v144 = vsel %vm142, %v143, %v141
    %v145 = vclz %v144
    %v146 = vsub.s32 %v145, 2
    %vm147 = vcmp.gt.s32.totalorder 0, %v146
    %v148 = vsel %vm147, 0, %v146
    %v149 = vsub.s32 32, %v148
    %v150 = vshll.u32 %v141, %v148
    %v151 = vshrl.u32 %v133, %v149
    %v152 = vor.u32 %v150, %v151
    %v153 = vsub.s32 4294967266, %v148
    %v154 = vadd.s32 %v153, 127
    %v155 = vshll.u32 %v154, 23
    %v156 = vor.u32 4788187, %v155
    %v157 = vand.u32 2147483647, %v156
    %v159 = vcvt.s32.f32 %v152
    %v160 = vmul.f32 %v159, %v157
    %v161 = vxor.u32 %v160, 2147483648
    %v162 = vsel %vm41, %v161, %v160
    %v163 = vsub.s32 4, %v139
    %v164 = vsel %vm41, %v163, %v139
    %v165 = vsel %vm40, %v31, %v162
    %v166 = vsel %vm40, 0, %v164
    %v167 = vmul.f32 %v165, %v165
    %v168 = vmul.f32 %v167, -0.001358992
    %v169 = vadd.f32 %v168, 0.041655596
    %v170 = vmul.f32 %v167, %v169
    %v171 = vadd.f32 %v170, -0.4999988
    %v172 = vmul.f32 %v167, %v171
    %v173 = vadd.f32 1.0, %v172
    %v174 = vmul.f32 %v165, %v165
    %v175 = vmul.f32 %v174, -0.00019511016
    %v176 = vadd.f32 %v175, 0.008332121
    %v177 = vmul.f32 %v174, %v176
    %v178 = vadd.f32 %v177, -0.16666654
    %v179 = vmul.f32 %v174, %v178
    %v180 = vadd.f32 %v179, 1.0
    %v181 = vmul.f32 %v180, %v165
    %vm182 = vweird.f32 %v31
    %v183 = vadd.s32 %v166, 3
    %v184 = vand.u32 %v183, 3
    %vm185 = vcmp.lt.s32.totalorder %v184, 2
    %vm186 = vcmp.eq.s32.totalorder %v184, 0
    %v187 = vxor.u32 %v181, 2147483648
    %v188 = vsel %vm186, %v173, %v187
    %vm189 = vcmp.eq.s32.totalorder %v184, 2
    %v190 = vxor.u32 %v173, 2147483648
    %v191 = vsel %vm189, %v190, %v181
    %v192 = vsel %vm185, %v188, %v191
    %v193 = vsel %vm182, nan, %v192
    %v194 = vand.u32 2147483647, %v32
    %vm195 = vcmp.le.f32.partialorder %v194, 0.7853982
    %vm196 = vcmp.lt.s32.totalorder %v32, 0
    %v197 = vand.u32 %v32, 2139095040
    %v198 = vshrl.u32 %v197, 23
    %v199 = vsub.s32 %v198, 127
    %v200 = vand.u32 2147483647, %v32
    %v201 = vand.u32 %v200, 8388607
    %v202 = vor.u32 %v201, 8388608
    %v203 = vsub.s32 0, %v202
    %v204 = vadd.s32 %v199, 1
    %vm205 = vcmp.gt.s32.totalorder %v204, 0
    %v206 = vsel %vm205, %v204, 0
    %v207 = vshrl.u32 %v206, 5
    %v208 = vand.u32 %v206, 31
    %v209 = vsub.s32 32, %v208
    %v210 = vshrl.u32 683565275, %v209
    %v211 = vshll.u32 683565275, %v208
    %v212 = vshrl.u32 2475754826, %v209
    %v213 = vor.u32 %v211, %v212
    %v214 = vshll.u32 2475754826, %v208
    %v215 = vshrl.u32 2131351028, %v209
    %v216 = vor.u32 %v214, %v215
    %v217 = vshll.u32 2131351028, %v208
    %v218 = vshrl.u32 2102212464, %v209
    %v219 = vor.u32 %v217, %v218
    %v220 = vshll.u32 2102212464, %v208
    %v221 = vshrl.u32 920167782, %v209
    %v222 = vor.u32 %v220, %v221
    %v223 = vshll.u32 920167782, %v208
    %v224 = vshrl.u32 1326507024, %v209
    %v225 = vor.u32 %v223, %v224
    %vm226 = vcmp.lt.s32.totalorder %v207, 1
    %vm227 = vcmp.lt.s32.totalorder %v207, 2
    %vm228 = vcmp.lt.s32.totalorder %v207, 3
    %vm229 = vcmp.lt.s32.totalorder %v207, 4
    %v230 = vsel %vm226, %v210, %v213
    %v231 = vsel %vm229, %v219, 2102212464
    %v232 = vsel %vm228, %v216, %v231
    %v233 = vsel %vm227, %v230, %v232
    %v234 = vsel %vm226, %v213, %v216
    %v235 = vsel %vm229, %v222, 920167782
    %v236 = vsel %vm228, %v219, %v235
    %v237 = vsel %vm227, %v234, %v236
    %v238 = vsel %vm226, %v216, %v219
    %v239 = vsel %vm229, %v225, 1326507024
    %v240 = vsel %vm228, %v222, %v239
    %v241 = vsel %vm227, %v238, %v240
    %v242 = vshll.u32 %v202, 8
    %v243 = vand.u32 %v242, 65535
    %v244 = vshrl.u32 %v242, 16
    %v245 = vand.u32 %v241, 65535
    %v246 = vshrl.u32 %v241, 16
    %v247 = vmul.u32 %v243, %v245
    %v248 = vmul.u32 %v243, %v246
    %v249 = vmul.u32 %v244, %v245
    %v250 = vmul.u32 %v244, %v246
    %v251 = vshll.u32 %v248, 16
    %v252 = vshrl.u32 %v248, 16
    %v253 = vshll.u32 %v249, 16
    %v254 = vshrl.u32 %v249, 16
    %vm255 = vc.u32 %v247, %v251
    %v256 = vsel %vm255, 1, 0
    %v257 = vadd.s32 %v247, %v251
    %v258 = vadd.s32 %v250, %v256
    %vm259 = vc.u32 %v257, %v253
    %v260 = vsel %vm259, 1, 0
    %v261 = vadd.s32 %v257, %v253
    %v262 = vadd.s32 %v258, %v260
    %v263 = vadd.s32 %v262, %v252
    %v264 = vadd.s32 %v263, %v254
    %v265 = vand.u32 %v242, 65535
    %v266 = vshrl.u32 %v242, 16
    %v267 = vand.u32 %v237, 65535
    %v268 = vshrl.u32 %v237, 16
    %v269 = vmul.u32 %v265, %v267
    %v270 = vmul.u32 %v265, %v268
    %v271 = vmul.u32 %v266, %v267
    %v272 = vmul.u32 %v266, %v268
    %v273 = vshll.u32 %v270, 16
    %v274 = vshrl.u32 %v270, 16
    %v275 = vshll.u32 %v271, 16
    %v276 = vshrl.u32 %v271, 16
    %vm277 = vc.u32 %v269, %v273
    %v278 = vsel %vm277, 1, 0
    %v279 = vadd.s32 %v269, %v273
    %v280 = vadd.s32 %v272, %v278
    %vm281 = vc.u32 %v279, %v275
    %v282 = vsel %vm281, 1, 0
    %v283 = vadd.s32 %v279, %v275
    %v284 = vadd.s32 %v280, %v282
    %v285 = vadd.s32 %v284, %v274
    %v286 = vadd.s32 %v285, %v276
    %v287 = vmul.u32 %v242, %v233
    %v288 = vadd.s32 %v264, %v283
    %vm289 = vc.u32 %v264, %v283
    %v290 = vadd.s32 %v286, 1
    %v291 = vsel %vm289, %v290, %v286
    %v292 = vadd.s32 %v287, %v291
    %v293 = vadd.s32 %v292, 536870912
    %v294 = vshrl.u32 %v293, 30
    %v295 = vshll.u32 %v294, 30
    %v296 = vsub.s32 %v292, %v295
    %vm297 = vcmp.lt.s32.totalorder %v296, 0
    %v298 = vsub.s32 0, %v296
    %v299 = vsel %vm297, %v298, %v296
    %v300 = vclz %v299
    %v301 = vsub.s32 %v300, 2
    %vm302 = vcmp.gt.s32.totalorder 0, %v301
    %v303 = vsel %vm302, 0, %v301
    %v304 = vsub.s32 32, %v303
    %v305 = vshll.u32 %v296, %v303
    %v306 = vshrl.u32 %v288, %v304
    %v307 = vor.u32 %v305, %v306
    %v308 = vsub.s32 4294967266, %v303
    %v309 = vadd.s32 %v308, 127
    %v310 = vshll.u32 %v309, 23
    %v311 = vor.u32 4788187, %v310
    %v312 = vand.u32 2147483647, %v311
    %v314 = vcvt.s32.f32 %v307
    %v315 = vmul.f32 %v314, %v312
    %v316 = vxor.u32 %v315, 2147483648
    %v317 = vsel %vm196, %v316, %v315
    %v318 = vsub.s32 4, %v294
    %v319 = vsel %vm196, %v318, %v294
    %v320 = vsel %vm195, %v32, %v317
    %v321 = vsel %vm195, 0, %v319
    %v322 = vmul.f32 %v320, %v320
    %v323 = vmul.f32 %v322, -0.001358992
    %v324 = vadd.f32 %v323, 0.041655596
    %v325 = vmul.f32 %v322, %v324
    %v326 = vadd.f32 %v325, -0.4999988
    %v327 = vmul.f32 %v322, %v326
    %v328 = vadd.f32 1.0, %v327
    %v329 = vmul.f32 %v320, %v320
    %v330 = vmul.f32 %v329, -0.00019511016
    %v331 = vadd.f32 %v330, 0.008332121
    %v332 = vmul.f32 %v329, %v331
    %v333 = vadd.f32 %v332, -0.16666654
    %v334 = vmul.f32 %v329, %v333
    %v335 = vadd.f32 %v334, 1.0
    %v336 = vmul.f32 %v335, %v320
    %vm337 = vweird.f32 %v32
    %v338 = vadd.s32 %v321, 3
    %v339 = vand.u32 %v338, 3
    %vm340 = vcmp.lt.s32.totalorder %v339, 2
    %vm341 = vcmp.eq.s32.totalorder %v339, 0
    %v342 = vxor.u32 %v336, 2147483648
    %v343 = vsel %vm341, %v328, %v342
    %vm344 = vcmp.eq.s32.totalorder %v339, 2
    %v345 = vxor.u32 %v328, 2147483648
    %v346 = vsel %vm344, %v345, %v336
    %v347 = vsel %vm340, %v343, %v346
    %v348 = vsel %vm337, nan, %v347
    %v349 = vand.u32 2147483647, %v33
    %vm350 = vcmp.le.f32.partialorder %v349, 0.7853982
    %vm351 = vcmp.lt.s32.totalorder %v33, 0
    %v352 = vand.u32 %v33, 2139095040
    %v353 = vshrl.u32 %v352, 23
    %v354 = vsub.s32 %v353, 127
    %v355 = vand.u32 2147483647, %v33
    %v356 = vand.u32 %v355, 8388607
    %v357 = vor.u32 %v356, 8388608
    %v358 = vsub.s32 0, %v357
    %v359 = vadd.s32 %v354, 1
    %vm360 = vcmp.gt.s32.totalorder %v359, 0
    %v361 = vsel %vm360, %v359, 0
    %v362 = vshrl.u32 %v361, 5
    %v363 = vand.u32 %v361, 31
    %v364 = vsub.s32 32, %v363
    %v365 = vshrl.u32 683565275, %v364
    %v366 = vshll.u32 683565275, %v363
    %v367 = vshrl.u32 2475754826, %v364
    %v368 = vor.u32 %v366, %v367
    %v369 = vshll.u32 2475754826, %v363
    %v370 = vshrl.u32 2131351028, %v364
    %v371 = vor.u32 %v369, %v370
    %v372 = vshll.u32 2131351028, %v363
    %v373 = vshrl.u32 2102212464, %v364
    %v374 = vor.u32 %v372, %v373
    %v375 = vshll.u32 2102212464, %v363
    %v376 = vshrl.u32 920167782, %v364
    %v377 = vor.u32 %v375, %v376
    %v378 = vshll.u32 920167782, %v363
    %v379 = vshrl.u32 1326507024, %v364
    %v380 = vor.u32 %v378, %v379
    %vm381 = vcmp.lt.s32.totalorder %v362, 1
    %vm382 = vcmp.lt.s32.totalorder %v362, 2
    %vm383 = vcmp.lt.s32.totalorder %v362, 3
    %vm384 = vcmp.lt.s32.totalorder %v362, 4
    %v385 = vsel %vm381, %v365, %v368
    %v386 = vsel %vm384, %v374, 2102212464
    %v387 = vsel %vm383, %v371, %v386
    %v388 = vsel %vm382, %v385, %v387
    %v389 = vsel %vm381, %v368, %v371
    %v390 = vsel %vm384, %v377, 920167782
    %v391 = vsel %vm383, %v374, %v390
    %v392 = vsel %vm382, %v389, %v391
    %v393 = vsel %vm381, %v371, %v374
    %v394 = vsel %vm384, %v380, 1326507024
    %v395 = vsel %vm383, %v377, %v394
    %v396 = vsel %vm382, %v393, %v395
    %v397 = vshll.u32 %v357, 8
    %v398 = vand.u32 %v397, 65535
    %v399 = vshrl.u32 %v397, 16
    %v400 = vand.u32 %v396, 65535
    %v401 = vshrl.u32 %v396, 16
    %v402 = vmul.u32 %v398, %v400
    %v403 = vmul.u32 %v398, %v401
    %v404 = vmul.u32 %v399, %v400
    %v405 = vmul.u32 %v399, %v401
    %v406 = vshll.u32 %v403, 16
    %v407 = vshrl.u32 %v403, 16
    %v408 = vshll.u32 %v404, 16
    %v409 = vshrl.u32 %v404, 16
    %vm410 = vc.u32 %v402, %v406
    %v411 = vsel %vm410, 1, 0
    %v412 = vadd.s32 %v402, %v406
    %v413 = vadd.s32 %v405, %v411
    %vm414 = vc.u32 %v412, %v408
    %v415 = vsel %vm414, 1, 0
    %v416 = vadd.s32 %v412, %v408
    %v417 = vadd.s32 %v413, %v415
    %v418 = vadd.s32 %v417, %v407
    %v419 = vadd.s32 %v418, %v409
    %v420 = vand.u32 %v397, 65535
    %v421 = vshrl.u32 %v397, 16
    %v422 = vand.u32 %v392, 65535
    %v423 = vshrl.u32 %v392, 16
    %v424 = vmul.u32 %v420, %v422
    %v425 = vmul.u32 %v420, %v423
    %v426 = vmul.u32 %v421, %v422
    %v427 = vmul.u32 %v421, %v423
    %v428 = vshll.u32 %v425, 16
    %v429 = vshrl.u32 %v425, 16
    %v430 = vshll.u32 %v426, 16
    %v431 = vshrl.u32 %v426, 16
    %vm432 = vc.u32 %v424, %v428
    %v433 = vsel %vm432, 1, 0
    %v434 = vadd.s32 %v424, %v428
    %v435 = vadd.s32 %v427, %v433
    %vm436 = vc.u32 %v434, %v430
    %v437 = vsel %vm436, 1, 0
    %v438 = vadd.s32 %v434, %v430
    %v439 = vadd.s32 %v435, %v437
    %v440 = vadd.s32 %v439, %v429
    %v441 = vadd.s32 %v440, %v431
    %v442 = vmul.u32 %v397, %v388
    %v443 = vadd.s32 %v419, %v438
    %vm444 = vc.u32 %v419, %v438
    %v445 = vadd.s32 %v441, 1
    %v446 = vsel %vm444, %v445, %v441
    %v447 = vadd.s32 %v442, %v446
    %v448 = vadd.s32 %v447, 536870912
    %v449 = vshrl.u32 %v448, 30
    %v450 = vshll.u32 %v449, 30
    %v451 = vsub.s32 %v447, %v450
    %vm452 = vcmp.lt.s32.totalorder %v451, 0
    %v453 = vsub.s32 0, %v451
    %v454 = vsel %vm452, %v453, %v451
    %v455 = vclz %v454
    %v456 = vsub.s32 %v455, 2
    %vm457 = vcmp.gt.s32.totalorder 0, %v456
    %v458 = vsel %vm457, 0, %v456
    %v459 = vsub.s32 32, %v458
    %v460 = vshll.u32 %v451, %v458
    %v461 = vshrl.u32 %v443, %v459
    %v462 = vor.u32 %v460, %v461
    %v463 = vsub.s32 4294967266, %v458
    %v464 = vadd.s32 %v463, 127
    %v465 = vshll.u32 %v464, 23
    %v466 = vor.u32 4788187, %v465
    %v467 = vand.u32 2147483647, %v466
    %v469 = vcvt.s32.f32 %v462
    %v470 = vmul.f32 %v469, %v467
    %v471 = vxor.u32 %v470, 2147483648
    %v472 = vsel %vm351, %v471, %v470
    %v473 = vsub.s32 4, %v449
    %v474 = vsel %vm351, %v473, %v449
    %v475 = vsel %vm350, %v33, %v472
    %v476 = vsel %vm350, 0, %v474
    %v477 = vmul.f32 %v475, %v475
    %v478 = vmul.f32 %v477, -0.001358992
    %v479 = vadd.f32 %v478, 0.041655596
    %v480 = vmul.f32 %v477, %v479
    %v481 = vadd.f32 %v480, -0.4999988
    %v482 = vmul.f32 %v477, %v481
    %v483 = vadd.f32 1.0, %v482
    %v484 = vmul.f32 %v475, %v475
    %v485 = vmul.f32 %v484, -0.00019511016
    %v486 = vadd.f32 %v485, 0.008332121
    %v487 = vmul.f32 %v484, %v486
    %v488 = vadd.f32 %v487, -0.16666654
    %v489 = vmul.f32 %v484, %v488
    %v490 = vadd.f32 %v489, 1.0
    %v491 = vmul.f32 %v490, %v475
    %vm492 = vweird.f32 %v33
    %v493 = vadd.s32 %v476, 3
    %v494 = vand.u32 %v493, 3
    %vm495 = vcmp.lt.s32.totalorder %v494, 2
    %vm496 = vcmp.eq.s32.totalorder %v494, 0
    %v497 = vxor.u32 %v491, 2147483648
    %v498 = vsel %vm496, %v483, %v497
    %vm499 = vcmp.eq.s32.totalorder %v494, 2
    %v500 = vxor.u32 %v483, 2147483648
    %v501 = vsel %vm499, %v500, %v491
    %v502 = vsel %vm495, %v498, %v501
    %v503 = vsel %vm492, nan, %v502
    %v504 = vand.u32 2147483647, %v34
    %vm505 = vcmp.le.f32.partialorder %v504, 0.7853982
    %vm506 = vcmp.lt.s32.totalorder %v34, 0
    %v507 = vand.u32 %v34, 2139095040
    %v508 = vshrl.u32 %v507, 23
    %v509 = vsub.s32 %v508, 127
    %v510 = vand.u32 2147483647, %v34
    %v511 = vand.u32 %v510, 8388607
    %v512 = vor.u32 %v511, 8388608
    %v513 = vsub.s32 0, %v512
    %v514 = vadd.s32 %v509, 1
    %vm515 = vcmp.gt.s32.totalorder %v514, 0
    %v516 = vsel %vm515, %v514, 0
    %v517 = vshrl.u32 %v516, 5
    %v518 = vand.u32 %v516, 31
    %v519 = vsub.s32 32, %v518
    %v520 = vshrl.u32 683565275, %v519
    %v521 = vshll.u32 683565275, %v518
    %v522 = vshrl.u32 2475754826, %v519
    %v523 = vor.u32 %v521, %v522
    %v524 = vshll.u32 2475754826, %v518
    %v525 = vshrl.u32 2131351028, %v519
    %v526 = vor.u32 %v524, %v525
    %v527 = vshll.u32 2131351028, %v518
    %v528 = vshrl.u32 2102212464, %v519
    %v529 = vor.u32 %v527, %v528
    %v530 = vshll.u32 2102212464, %v518
    %v531 = vshrl.u32 920167782, %v519
    %v532 = vor.u32 %v530, %v531
    %v533 = vshll.u32 920167782, %v518
    %v534 = vshrl.u32 1326507024, %v519
    %v535 = vor.u32 %v533, %v534
    %vm536 = vcmp.lt.s32.totalorder %v517, 1
    %vm537 = vcmp.lt.s32.totalorder %v517, 2
    %vm538 = vcmp.lt.s32.totalorder %v517, 3
    %vm539 = vcmp.lt.s32.totalorder %v517, 4
    %v540 = vsel %vm536, %v520, %v523
    %v541 = vsel %vm539, %v529, 2102212464
    %v542 = vsel %vm538, %v526, %v541
    %v543 = vsel %vm537, %v540, %v542
    %v544 = vsel %vm536, %v523, %v526
    %v545 = vsel %vm539, %v532, 920167782
    %v546 = vsel %vm538, %v529, %v545
    %v547 = vsel %vm537, %v544, %v546
    %v548 = vsel %vm536, %v526, %v529
    %v549 = vsel %vm539, %v535, 1326507024
    %v550 = vsel %vm538, %v532, %v549
    %v551 = vsel %vm537, %v548, %v550
    %v552 = vshll.u32 %v512, 8
    %v553 = vand.u32 %v552, 65535
    %v554 = vshrl.u32 %v552, 16
    %v555 = vand.u32 %v551, 65535
    %v556 = vshrl.u32 %v551, 16
    %v557 = vmul.u32 %v553, %v555
    %v558 = vmul.u32 %v553, %v556
    %v559 = vmul.u32 %v554, %v555
    %v560 = vmul.u32 %v554, %v556
    %v561 = vshll.u32 %v558, 16
    %v562 = vshrl.u32 %v558, 16
    %v563 = vshll.u32 %v559, 16
    %v564 = vshrl.u32 %v559, 16
    %vm565 = vc.u32 %v557, %v561
    %v566 = vsel %vm565, 1, 0
    %v567 = vadd.s32 %v557, %v561
    %v568 = vadd.s32 %v560, %v566
    %vm569 = vc.u32 %v567, %v563
    %v570 = vsel %vm569, 1, 0
    %v571 = vadd.s32 %v567, %v563
    %v572 = vadd.s32 %v568, %v570
    %v573 = vadd.s32 %v572, %v562
    %v574 = vadd.s32 %v573, %v564
    %v575 = vand.u32 %v552, 65535
    %v576 = vshrl.u32 %v552, 16
    %v577 = vand.u32 %v547, 65535
    %v578 = vshrl.u32 %v547, 16
    %v579 = vmul.u32 %v575, %v577
    %v580 = vmul.u32 %v575, %v578
    %v581 = vmul.u32 %v576, %v577
    %v582 = vmul.u32 %v576, %v578
    %v583 = vshll.u32 %v580, 16
    %v584 = vshrl.u32 %v580, 16
    %v585 = vshll.u32 %v581, 16
    %v586 = vshrl.u32 %v581, 16
    %vm587 = vc.u32 %v579, %v583
    %v588 = vsel %vm587, 1, 0
    %v589 = vadd.s32 %v579, %v583
    %v590 = vadd.s32 %v582, %v588
    %vm591 = vc.u32 %v589, %v585
    %v592 = vsel %vm591, 1, 0
    %v593 = vadd.s32 %v589, %v585
    %v594 = vadd.s32 %v590, %v592
    %v595 = vadd.s32 %v594, %v584
    %v596 = vadd.s32 %v595, %v586
    %v597 = vmul.u32 %v552, %v543
    %v598 = vadd.s32 %v574, %v593
    %vm599 = vc.u32 %v574, %v593
    %v600 = vadd.s32 %v596, 1
    %v601 = vsel %vm599, %v600, %v596
    %v602 = vadd.s32 %v597, %v601
    %v603 = vadd.s32 %v602, 536870912
    %v604 = vshrl.u32 %v603, 30
    %v605 = vshll.u32 %v604, 30
    %v606 = vsub.s32 %v602, %v605
    %vm607 = vcmp.lt.s32.totalorder %v606, 0
    %v608 = vsub.s32 0, %v606
    %v609 = vsel %vm607, %v608, %v606
    %v610 = vclz %v609
    %v611 = vsub.s32 %v610, 2
    %vm612 = vcmp.gt.s32.totalorder 0, %v611
    %v613 = vsel %vm612, 0, %v611
    %v614 = vsub.s32 32, %v613
    %v615 = vshll.u32 %v606, %v613
    %v616 = vshrl.u32 %v598, %v614
    %v617 = vor.u32 %v615, %v616
    %v618 = vsub.s32 4294967266, %v613
    %v619 = vadd.s32 %v618, 127
    %v620 = vshll.u32 %v619, 23
    %v621 = vor.u32 4788187, %v620
    %v622 = vand.u32 2147483647, %v621
    %v624 = vcvt.s32.f32 %v617
    %v625 = vmul.f32 %v624, %v622
    %v626 = vxor.u32 %v625, 2147483648
    %v627 = vsel %vm506, %v626, %v625
    %v628 = vsub.s32 4, %v604
    %v629 = vsel %vm506, %v628, %v604
    %v630 = vsel %vm505, %v34, %v627
    %v631 = vsel %vm505, 0, %v629
    %v632 = vmul.f32 %v630, %v630
    %v633 = vmul.f32 %v632, -0.001358992
    %v634 = vadd.f32 %v633, 0.041655596
    %v635 = vmul.f32 %v632, %v634
    %v636 = vadd.f32 %v635, -0.4999988
    %v637 = vmul.f32 %v632, %v636
    %v638 = vadd.f32 1.0, %v637
    %v639 = vmul.f32 %v630, %v630
    %v640 = vmul.f32 %v639, -0.00019511016
    %v641 = vadd.f32 %v640, 0.008332121
    %v642 = vmul.f32 %v639, %v641
    %v643 = vadd.f32 %v642, -0.16666654
    %v644 = vmul.f32 %v639, %v643
    %v645 = vadd.f32 %v644, 1.0
    %v646 = vmul.f32 %v645, %v630
    %vm647 = vweird.f32 %v34
    %v648 = vadd.s32 %v631, 3
    %v649 = vand.u32 %v648, 3
    %vm650 = vcmp.lt.s32.totalorder %v649, 2
    %vm651 = vcmp.eq.s32.totalorder %v649, 0
    %v652 = vxor.u32 %v646, 2147483648
    %v653 = vsel %vm651, %v638, %v652
    %vm654 = vcmp.eq.s32.totalorder %v649, 2
    %v655 = vxor.u32 %v638, 2147483648
    %v656 = vsel %vm654, %v655, %v646
    %v657 = vsel %vm650, %v653, %v656
    %v658 = vsel %vm647, nan, %v657
    %v659 = vand.u32 2147483647, %v35
    %vm660 = vcmp.le.f32.partialorder %v659, 0.7853982
    %vm661 = vcmp.lt.s32.totalorder %v35, 0
    %v662 = vand.u32 %v35, 2139095040
    %v663 = vshrl.u32 %v662, 23
    %v664 = vsub.s32 %v663, 127
    %v665 = vand.u32 2147483647, %v35
    %v666 = vand.u32 %v665, 8388607
    %v667 = vor.u32 %v666, 8388608
    %v668 = vsub.s32 0, %v667
    %v669 = vadd.s32 %v664, 1
    %vm670 = vcmp.gt.s32.totalorder %v669, 0
    %v671 = vsel %vm670, %v669, 0
    %v672 = vshrl.u32 %v671, 5
    %v673 = vand.u32 %v671, 31
    %v674 = vsub.s32 32, %v673
    %v675 = vshrl.u32 683565275, %v674
    %v676 = vshll.u32 683565275, %v673
    %v677 = vshrl.u32 2475754826, %v674
    %v678 = vor.u32 %v676, %v677
    %v679 = vshll.u32 2475754826, %v673
    %v680 = vshrl.u32 2131351028, %v674
    %v681 = vor.u32 %v679, %v680
    %v682 = vshll.u32 2131351028, %v673
    %v683 = vshrl.u32 2102212464, %v674
    %v684 = vor.u32 %v682, %v683
    %v685 = vshll.u32 2102212464, %v673
    %v686 = vshrl.u32 920167782, %v674
    %v687 = vor.u32 %v685, %v686
    %v688 = vshll.u32 920167782, %v673
    %v689 = vshrl.u32 1326507024, %v674
    %v690 = vor.u32 %v688, %v689
    %vm691 = vcmp.lt.s32.totalorder %v672, 1
    %vm692 = vcmp.lt.s32.totalorder %v672, 2
    %vm693 = vcmp.lt.s32.totalorder %v672, 3
    %vm694 = vcmp.lt.s32.totalorder %v672, 4
    %v695 = vsel %vm691, %v675, %v678
    %v696 = vsel %vm694, %v684, 2102212464
    %v697 = vsel %vm693, %v681, %v696
    %v698 = vsel %vm692, %v695, %v697
    %v699 = vsel %vm691, %v678, %v681
    %v700 = vsel %vm694, %v687, 920167782
    %v701 = vsel %vm693, %v684, %v700
    %v702 = vsel %vm692, %v699, %v701
    %v703 = vsel %vm691, %v681, %v684
    %v704 = vsel %vm694, %v690, 1326507024
    %v705 = vsel %vm693, %v687, %v704
    %v706 = vsel %vm692, %v703, %v705
    %v707 = vshll.u32 %v667, 8
    %v708 = vand.u32 %v707, 65535
    %v709 = vshrl.u32 %v707, 16
    %v710 = vand.u32 %v706, 65535
    %v711 = vshrl.u32 %v706, 16
    %v712 = vmul.u32 %v708, %v710
    %v713 = vmul.u32 %v708, %v711
    %v714 = vmul.u32 %v709, %v710
    %v715 = vmul.u32 %v709, %v711
    %v716 = vshll.u32 %v713, 16
    %v717 = vshrl.u32 %v713, 16
    %v718 = vshll.u32 %v714, 16
    %v719 = vshrl.u32 %v714, 16
    %vm720 = vc.u32 %v712, %v716
    %v721 = vsel %vm720, 1, 0
    %v722 = vadd.s32 %v712, %v716
    %v723 = vadd.s32 %v715, %v721
    %vm724 = vc.u32 %v722, %v718
    %v725 = vsel %vm724, 1, 0
    %v726 = vadd.s32 %v722, %v718
    %v727 = vadd.s32 %v723, %v725
    %v728 = vadd.s32 %v727, %v717
    %v729 = vadd.s32 %v728, %v719
    %v730 = vand.u32 %v707, 65535
    %v731 = vshrl.u32 %v707, 16
    %v732 = vand.u32 %v702, 65535
    %v733 = vshrl.u32 %v702, 16
    %v734 = vmul.u32 %v730, %v732
    %v735 = vmul.u32 %v730, %v733
    %v736 = vmul.u32 %v731, %v732
    %v737 = vmul.u32 %v731, %v733
    %v738 = vshll.u32 %v735, 16
    %v739 = vshrl.u32 %v735, 16
    %v740 = vshll.u32 %v736, 16
    %v741 = vshrl.u32 %v736, 16
    %vm742 = vc.u32 %v734, %v738
    %v743 = vsel %vm742, 1, 0
    %v744 = vadd.s32 %v734, %v738
    %v745 = vadd.s32 %v737, %v743
    %vm746 = vc.u32 %v744, %v740
    %v747 = vsel %vm746, 1, 0
    %v748 = vadd.s32 %v744, %v740
    %v749 = vadd.s32 %v745, %v747
    %v750 = vadd.s32 %v749, %v739
    %v751 = vadd.s32 %v750, %v741
    %v752 = vmul.u32 %v707, %v698
    %v753 = vadd.s32 %v729, %v748
    %vm754 = vc.u32 %v729, %v748
    %v755 = vadd.s32 %v751, 1
    %v756 = vsel %vm754, %v755, %v751
    %v757 = vadd.s32 %v752, %v756
    %v758 = vadd.s32 %v757, 536870912
    %v759 = vshrl.u32 %v758, 30
    %v760 = vshll.u32 %v759, 30
    %v761 = vsub.s32 %v757, %v760
    %vm762 = vcmp.lt.s32.totalorder %v761, 0
    %v763 = vsub.s32 0, %v761
    %v764 = vsel %vm762, %v763, %v761
    %v765 = vclz %v764
    %v766 = vsub.s32 %v765, 2
    %vm767 = vcmp.gt.s32.totalorder 0, %v766
    %v768 = vsel %vm767, 0, %v766
    %v769 = vsub.s32 32, %v768
    %v770 = vshll.u32 %v761, %v768
    %v771 = vshrl.u32 %v753, %v769
    %v772 = vor.u32 %v770, %v771
    %v773 = vsub.s32 4294967266, %v768
    %v774 = vadd.s32 %v773, 127
    %v775 = vshll.u32 %v774, 23
    %v776 = vor.u32 4788187, %v775
    %v777 = vand.u32 2147483647, %v776
    %v779 = vcvt.s32.f32 %v772
    %v780 = vmul.f32 %v779, %v777
    %v781 = vxor.u32 %v780, 2147483648
    %v782 = vsel %vm661, %v781, %v780
    %v783 = vsub.s32 4, %v759
    %v784 = vsel %vm661, %v783, %v759
    %v785 = vsel %vm660, %v35, %v782
    %v786 = vsel %vm660, 0, %v784
    %v787 = vmul.f32 %v785, %v785
    %v788 = vmul.f32 %v787, -0.001358992
    %v789 = vadd.f32 %v788, 0.041655596
    %v790 = vmul.f32 %v787, %v789
    %v791 = vadd.f32 %v790, -0.4999988
    %v792 = vmul.f32 %v787, %v791
    %v793 = vadd.f32 1.0, %v792
    %v794 = vmul.f32 %v785, %v785
    %v795 = vmul.f32 %v794, -0.00019511016
    %v796 = vadd.f32 %v795, 0.008332121
    %v797 = vmul.f32 %v794, %v796
    %v798 = vadd.f32 %v797, -0.16666654
    %v799 = vmul.f32 %v794, %v798
    %v800 = vadd.f32 %v799, 1.0
    %v801 = vmul.f32 %v800, %v785
    %vm802 = vweird.f32 %v35
    %v803 = vadd.s32 %v786, 3
    %v804 = vand.u32 %v803, 3
    %vm805 = vcmp.lt.s32.totalorder %v804, 2
    %vm806 = vcmp.eq.s32.totalorder %v804, 0
    %v807 = vxor.u32 %v801, 2147483648
    %v808 = vsel %vm806, %v793, %v807
    %vm809 = vcmp.eq.s32.totalorder %v804, 2
    %v810 = vxor.u32 %v793, 2147483648
    %v811 = vsel %vm809, %v810, %v801
    %v812 = vsel %vm805, %v808, %v811
    %v813 = vsel %vm802, nan, %v812
    %v814 = vand.u32 2147483647, %v36
    %vm815 = vcmp.le.f32.partialorder %v814, 0.7853982
    %vm816 = vcmp.lt.s32.totalorder %v36, 0
    %v817 = vand.u32 %v36, 2139095040
    %v818 = vshrl.u32 %v817, 23
    %v819 = vsub.s32 %v818, 127
    %v820 = vand.u32 2147483647, %v36
    %v821 = vand.u32 %v820, 8388607
    %v822 = vor.u32 %v821, 8388608
    %v823 = vsub.s32 0, %v822
    %v824 = vadd.s32 %v819, 1
    %vm825 = vcmp.gt.s32.totalorder %v824, 0
    %v826 = vsel %vm825, %v824, 0
    %v827 = vshrl.u32 %v826, 5
    %v828 = vand.u32 %v826, 31
    %v829 = vsub.s32 32, %v828
    %v830 = vshrl.u32 683565275, %v829
    %v831 = vshll.u32 683565275, %v828
    %v832 = vshrl.u32 2475754826, %v829
    %v833 = vor.u32 %v831, %v832
    %v834 = vshll.u32 2475754826, %v828
    %v835 = vshrl.u32 2131351028, %v829
    %v836 = vor.u32 %v834, %v835
    %v837 = vshll.u32 2131351028, %v828
    %v838 = vshrl.u32 2102212464, %v829
    %v839 = vor.u32 %v837, %v838
    %v840 = vshll.u32 2102212464, %v828
    %v841 = vshrl.u32 920167782, %v829
    %v842 = vor.u32 %v840, %v841
    %v843 = vshll.u32 920167782, %v828
    %v844 = vshrl.u32 1326507024, %v829
    %v845 = vor.u32 %v843, %v844
    %vm846 = vcmp.lt.s32.totalorder %v827, 1
    %vm847 = vcmp.lt.s32.totalorder %v827, 2
    %vm848 = vcmp.lt.s32.totalorder %v827, 3
    %vm849 = vcmp.lt.s32.totalorder %v827, 4
    %v850 = vsel %vm846, %v830, %v833
    %v851 = vsel %vm849, %v839, 2102212464
    %v852 = vsel %vm848, %v836, %v851
    %v853 = vsel %vm847, %v850, %v852
    %v854 = vsel %vm846, %v833, %v836
    %v855 = vsel %vm849, %v842, 920167782
    %v856 = vsel %vm848, %v839, %v855
    %v857 = vsel %vm847, %v854, %v856
    %v858 = vsel %vm846, %v836, %v839
    %v859 = vsel %vm849, %v845, 1326507024
    %v860 = vsel %vm848, %v842, %v859
    %v861 = vsel %vm847, %v858, %v860
    %v862 = vshll.u32 %v822, 8
    %v863 = vand.u32 %v862, 65535
    %v864 = vshrl.u32 %v862, 16
    %v865 = vand.u32 %v861, 65535
    %v866 = vshrl.u32 %v861, 16
    %v867 = vmul.u32 %v863, %v865
    %v868 = vmul.u32 %v863, %v866
    %v869 = vmul.u32 %v864, %v865
    %v870 = vmul.u32 %v864, %v866
    %v871 = vshll.u32 %v868, 16
    %v872 = vshrl.u32 %v868, 16
    %v873 = vshll.u32 %v869, 16
    %v874 = vshrl.u32 %v869, 16
    %vm875 = vc.u32 %v867, %v871
    %v876 = vsel %vm875, 1, 0
    %v877 = vadd.s32 %v867, %v871
    %v878 = vadd.s32 %v870, %v876
    %vm879 = vc.u32 %v877, %v873
    %v880 = vsel %vm879, 1, 0
    %v881 = vadd.s32 %v877, %v873
    %v882 = vadd.s32 %v878, %v880
    %v883 = vadd.s32 %v882, %v872
    %v884 = vadd.s32 %v883, %v874
    %v885 = vand.u32 %v862, 65535
    %v886 = vshrl.u32 %v862, 16
    %v887 = vand.u32 %v857, 65535
    %v888 = vshrl.u32 %v857, 16
    %v889 = vmul.u32 %v885, %v887
    %v890 = vmul.u32 %v885, %v888
    %v891 = vmul.u32 %v886, %v887
    %v892 = vmul.u32 %v886, %v888
    %v893 = vshll.u32 %v890, 16
    %v894 = vshrl.u32 %v890, 16
    %v895 = vshll.u32 %v891, 16
    %v896 = vshrl.u32 %v891, 16
    %vm897 = vc.u32 %v889, %v893
    %v898 = vsel %vm897, 1, 0
    %v899 = vadd.s32 %v889, %v893
    %v900 = vadd.s32 %v892, %v898
    %vm901 = vc.u32 %v899, %v895
    %v902 = vsel %vm901, 1, 0
    %v903 = vadd.s32 %v899, %v895
    %v904 = vadd.s32 %v900, %v902
    %v905 = vadd.s32 %v904, %v894
    %v906 = vadd.s32 %v905, %v896
    %v907 = vmul.u32 %v862, %v853
    %v908 = vadd.s32 %v884, %v903
    %vm909 = vc.u32 %v884, %v903
    %v910 = vadd.s32 %v906, 1
    %v911 = vsel %vm909, %v910, %v906
    %v912 = vadd.s32 %v907, %v911
    %v913 = vadd.s32 %v912, 536870912
    %v914 = vshrl.u32 %v913, 30
    %v915 = vshll.u32 %v914, 30
    %v916 = vsub.s32 %v912, %v915
    %vm917 = vcmp.lt.s32.totalorder %v916, 0
    %v918 = vsub.s32 0, %v916
    %v919 = vsel %vm917, %v918, %v916
    %v920 = vclz %v919
    %v921 = vsub.s32 %v920, 2
    %vm922 = vcmp.gt.s32.totalorder 0, %v921
    %v923 = vsel %vm922, 0, %v921
    %v924 = vsub.s32 32, %v923
    %v925 = vshll.u32 %v916, %v923
    %v926 = vshrl.u32 %v908, %v924
    %v927 = vor.u32 %v925, %v926
    %v928 = vsub.s32 4294967266, %v923
    %v929 = vadd.s32 %v928, 127
    %v930 = vshll.u32 %v929, 23
    %v931 = vor.u32 4788187, %v930
    %v932 = vand.u32 2147483647, %v931
    %v934 = vcvt.s32.f32 %v927
    %v935 = vmul.f32 %v934, %v932
    %v936 = vxor.u32 %v935, 2147483648
    %v937 = vsel %vm816, %v936, %v935
    %v938 = vsub.s32 4, %v914
    %v939 = vsel %vm816, %v938, %v914
    %v940 = vsel %vm815, %v36, %v937
    %v941 = vsel %vm815, 0, %v939
    %v942 = vmul.f32 %v940, %v940
    %v943 = vmul.f32 %v942, -0.001358992
    %v944 = vadd.f32 %v943, 0.041655596
    %v945 = vmul.f32 %v942, %v944
    %v946 = vadd.f32 %v945, -0.4999988
    %v947 = vmul.f32 %v942, %v946
    %v948 = vadd.f32 1.0, %v947
    %v949 = vmul.f32 %v940, %v940
    %v950 = vmul.f32 %v949, -0.00019511016
    %v951 = vadd.f32 %v950, 0.008332121
    %v952 = vmul.f32 %v949, %v951
    %v953 = vadd.f32 %v952, -0.16666654
    %v954 = vmul.f32 %v949, %v953
    %v955 = vadd.f32 %v954, 1.0
    %v956 = vmul.f32 %v955, %v940
    %vm957 = vweird.f32 %v36
    %v958 = vadd.s32 %v941, 3
    %v959 = vand.u32 %v958, 3
    %vm960 = vcmp.lt.s32.totalorder %v959, 2
    %vm961 = vcmp.eq.s32.totalorder %v959, 0
    %v962 = vxor.u32 %v956, 2147483648
    %v963 = vsel %vm961, %v948, %v962
    %vm964 = vcmp.eq.s32.totalorder %v959, 2
    %v965 = vxor.u32 %v948, 2147483648
    %v966 = vsel %vm964, %v965, %v956
    %v967 = vsel %vm960, %v963, %v966
    %v968 = vsel %vm957, nan, %v967
    %v969 = vand.u32 2147483647, %v37
    %vm970 = vcmp.le.f32.partialorder %v969, 0.7853982
    %vm971 = vcmp.lt.s32.totalorder %v37, 0
    %v972 = vand.u32 %v37, 2139095040
    %v973 = vshrl.u32 %v972, 23
    %v974 = vsub.s32 %v973, 127
    %v975 = vand.u32 2147483647, %v37
    %v976 = vand.u32 %v975, 8388607
    %v977 = vor.u32 %v976, 8388608
    %v978 = vsub.s32 0, %v977
    %v979 = vadd.s32 %v974, 1
    %vm980 = vcmp.gt.s32.totalorder %v979, 0
    %v981 = vsel %vm980, %v979, 0
    %v982 = vshrl.u32 %v981, 5
    %v983 = vand.u32 %v981, 31
    %v984 = vsub.s32 32, %v983
    %v985 = vshrl.u32 683565275, %v984
    %v986 = vshll.u32 683565275, %v983
    %v987 = vshrl.u32 2475754826, %v984
    %v988 = vor.u32 %v986, %v987
    %v989 = vshll.u32 2475754826, %v983
    %v990 = vshrl.u32 2131351028, %v984
    %v991 = vor.u32 %v989, %v990
    %v992 = vshll.u32 2131351028, %v983
    %v993 = vshrl.u32 2102212464, %v984
    %v994 = vor.u32 %v992, %v993
    %v995 = vshll.u32 2102212464, %v983
    %v996 = vshrl.u32 920167782, %v984
    %v997 = vor.u32 %v995, %v996
    %v998 = vshll.u32 920167782, %v983
    %v999 = vshrl.u32 1326507024, %v984
    %v1000 = vor.u32 %v998, %v999
    %vm1001 = vcmp.lt.s32.totalorder %v982, 1
    %vm1002 = vcmp.lt.s32.totalorder %v982, 2
    %vm1003 = vcmp.lt.s32.totalorder %v982, 3
    %vm1004 = vcmp.lt.s32.totalorder %v982, 4
    %v1005 = vsel %vm1001, %v985, %v988
    %v1006 = vsel %vm1004, %v994, 2102212464
    %v1007 = vsel %vm1003, %v991, %v1006
    %v1008 = vsel %vm1002, %v1005, %v1007
    %v1009 = vsel %vm1001, %v988, %v991
    %v1010 = vsel %vm1004, %v997, 920167782
    %v1011 = vsel %vm1003, %v994, %v1010
    %v1012 = vsel %vm1002, %v1009, %v1011
    %v1013 = vsel %vm1001, %v991, %v994
    %v1014 = vsel %vm1004, %v1000, 1326507024
    %v1015 = vsel %vm1003, %v997, %v1014
    %v1016 = vsel %vm1002, %v1013, %v1015
    %v1017 = vshll.u32 %v977, 8
    %v1018 = vand.u32 %v1017, 65535
    %v1019 = vshrl.u32 %v1017, 16
    %v1020 = vand.u32 %v1016, 65535
    %v1021 = vshrl.u32 %v1016, 16
    %v1022 = vmul.u32 %v1018, %v1020
    %v1023 = vmul.u32 %v1018, %v1021
    %v1024 = vmul.u32 %v1019, %v1020
    %v1025 = vmul.u32 %v1019, %v1021
    %v1026 = vshll.u32 %v1023, 16
    %v1027 = vshrl.u32 %v1023, 16
    %v1028 = vshll.u32 %v1024, 16
    %v1029 = vshrl.u32 %v1024, 16
    %vm1030 = vc.u32 %v1022, %v1026
    %v1031 = vsel %vm1030, 1, 0
    %v1032 = vadd.s32 %v1022, %v1026
    %v1033 = vadd.s32 %v1025, %v1031
    %vm1034 = vc.u32 %v1032, %v1028
    %v1035 = vsel %vm1034, 1, 0
    %v1036 = vadd.s32 %v1032, %v1028
    %v1037 = vadd.s32 %v1033, %v1035
    %v1038 = vadd.s32 %v1037, %v1027
    %v1039 = vadd.s32 %v1038, %v1029
    %v1040 = vand.u32 %v1017, 65535
    %v1041 = vshrl.u32 %v1017, 16
    %v1042 = vand.u32 %v1012, 65535
    %v1043 = vshrl.u32 %v1012, 16
    %v1044 = vmul.u32 %v1040, %v1042
    %v1045 = vmul.u32 %v1040, %v1043
    %v1046 = vmul.u32 %v1041, %v1042
    %v1047 = vmul.u32 %v1041, %v1043
    %v1048 = vshll.u32 %v1045, 16
    %v1049 = vshrl.u32 %v1045, 16
    %v1050 = vshll.u32 %v1046, 16
    %v1051 = vshrl.u32 %v1046, 16
    %vm1052 = vc.u32 %v1044, %v1048
    %v1053 = vsel %vm1052, 1, 0
    %v1054 = vadd.s32 %v1044, %v1048
    %v1055 = vadd.s32 %v1047, %v1053
    %vm1056 = vc.u32 %v1054, %v1050
    %v1057 = vsel %vm1056, 1, 0
    %v1058 = vadd.s32 %v1054, %v1050
    %v1059 = vadd.s32 %v1055, %v1057
    %v1060 = vadd.s32 %v1059, %v1049
    %v1061 = vadd.s32 %v1060, %v1051
    %v1062 = vmul.u32 %v1017, %v1008
    %v1063 = vadd.s32 %v1039, %v1058
    %vm1064 = vc.u32 %v1039, %v1058
    %v1065 = vadd.s32 %v1061, 1
    %v1066 = vsel %vm1064, %v1065, %v1061
    %v1067 = vadd.s32 %v1062, %v1066
    %v1068 = vadd.s32 %v1067, 536870912
    %v1069 = vshrl.u32 %v1068, 30
    %v1070 = vshll.u32 %v1069, 30
    %v1071 = vsub.s32 %v1067, %v1070
    %vm1072 = vcmp.lt.s32.totalorder %v1071, 0
    %v1073 = vsub.s32 0, %v1071
    %v1074 = vsel %vm1072, %v1073, %v1071
    %v1075 = vclz %v1074
    %v1076 = vsub.s32 %v1075, 2
    %vm1077 = vcmp.gt.s32.totalorder 0, %v1076
    %v1078 = vsel %vm1077, 0, %v1076
    %v1079 = vsub.s32 32, %v1078
    %v1080 = vshll.u32 %v1071, %v1078
    %v1081 = vshrl.u32 %v1063, %v1079
    %v1082 = vor.u32 %v1080, %v1081
    %v1083 = vsub.s32 4294967266, %v1078
    %v1084 = vadd.s32 %v1083, 127
    %v1085 = vshll.u32 %v1084, 23
    %v1086 = vor.u32 4788187, %v1085
    %v1087 = vand.u32 2147483647, %v1086
    %v1089 = vcvt.s32.f32 %v1082
    %v1090 = vmul.f32 %v1089, %v1087
    %v1091 = vxor.u32 %v1090, 2147483648
    %v1092 = vsel %vm971, %v1091, %v1090
    %v1093 = vsub.s32 4, %v1069
    %v1094 = vsel %vm971, %v1093, %v1069
    %v1095 = vsel %vm970, %v37, %v1092
    %v1096 = vsel %vm970, 0, %v1094
    %v1097 = vmul.f32 %v1095, %v1095
    %v1098 = vmul.f32 %v1097, -0.001358992
    %v1099 = vadd.f32 %v1098, 0.041655596
    %v1100 = vmul.f32 %v1097, %v1099
    %v1101 = vadd.f32 %v1100, -0.4999988
    %v1102 = vmul.f32 %v1097, %v1101
    %v1103 = vadd.f32 1.0, %v1102
    %v1104 = vmul.f32 %v1095, %v1095
    %v1105 = vmul.f32 %v1104, -0.00019511016
    %v1106 = vadd.f32 %v1105, 0.008332121
    %v1107 = vmul.f32 %v1104, %v1106
    %v1108 = vadd.f32 %v1107, -0.16666654
    %v1109 = vmul.f32 %v1104, %v1108
    %v1110 = vadd.f32 %v1109, 1.0
    %v1111 = vmul.f32 %v1110, %v1095
    %vm1112 = vweird.f32 %v37
    %v1113 = vadd.s32 %v1096, 3
    %v1114 = vand.u32 %v1113, 3
    %vm1115 = vcmp.lt.s32.totalorder %v1114, 2
    %vm1116 = vcmp.eq.s32.totalorder %v1114, 0
    %v1117 = vxor.u32 %v1111, 2147483648
    %v1118 = vsel %vm1116, %v1103, %v1117
    %vm1119 = vcmp.eq.s32.totalorder %v1114, 2
    %v1120 = vxor.u32 %v1103, 2147483648
    %v1121 = vsel %vm1119, %v1120, %v1111
    %v1122 = vsel %vm1115, %v1118, %v1121
    %v1123 = vsel %vm1112, nan, %v1122
    %v1124 = vand.u32 2147483647, %v38
    %vm1125 = vcmp.le.f32.partialorder %v1124, 0.7853982
    %vm1126 = vcmp.lt.s32.totalorder %v38, 0
    %v1127 = vand.u32 %v38, 2139095040
    %v1128 = vshrl.u32 %v1127, 23
    %v1129 = vsub.s32 %v1128, 127
    %v1130 = vand.u32 2147483647, %v38
    %v1131 = vand.u32 %v1130, 8388607
    %v1132 = vor.u32 %v1131, 8388608
    %v1133 = vsub.s32 0, %v1132
    %v1134 = vadd.s32 %v1129, 1
    %vm1135 = vcmp.gt.s32.totalorder %v1134, 0
    %v1136 = vsel %vm1135, %v1134, 0
    %v1137 = vshrl.u32 %v1136, 5
    %v1138 = vand.u32 %v1136, 31
    %v1139 = vsub.s32 32, %v1138
    %v1140 = vshrl.u32 683565275, %v1139
    %v1141 = vshll.u32 683565275, %v1138
    %v1142 = vshrl.u32 2475754826, %v1139
    %v1143 = vor.u32 %v1141, %v1142
    %v1144 = vshll.u32 2475754826, %v1138
    %v1145 = vshrl.u32 2131351028, %v1139
    %v1146 = vor.u32 %v1144, %v1145
    %v1147 = vshll.u32 2131351028, %v1138
    %v1148 = vshrl.u32 2102212464, %v1139
    %v1149 = vor.u32 %v1147, %v1148
    %v1150 = vshll.u32 2102212464, %v1138
    %v1151 = vshrl.u32 920167782, %v1139
    %v1152 = vor.u32 %v1150, %v1151
    %v1153 = vshll.u32 920167782, %v1138
    %v1154 = vshrl.u32 1326507024, %v1139
    %v1155 = vor.u32 %v1153, %v1154
    %vm1156 = vcmp.lt.s32.totalorder %v1137, 1
    %vm1157 = vcmp.lt.s32.totalorder %v1137, 2
    %vm1158 = vcmp.lt.s32.totalorder %v1137, 3
    %vm1159 = vcmp.lt.s32.totalorder %v1137, 4
    %v1160 = vsel %vm1156, %v1140, %v1143
    %v1161 = vsel %vm1159, %v1149, 2102212464
    %v1162 = vsel %vm1158, %v1146, %v1161
    %v1163 = vsel %vm1157, %v1160, %v1162
    %v1164 = vsel %vm1156, %v1143, %v1146
    %v1165 = vsel %vm1159, %v1152, 920167782
    %v1166 = vsel %vm1158, %v1149, %v1165
    %v1167 = vsel %vm1157, %v1164, %v1166
    %v1168 = vsel %vm1156, %v1146, %v1149
    %v1169 = vsel %vm1159, %v1155, 1326507024
    %v1170 = vsel %vm1158, %v1152, %v1169
    %v1171 = vsel %vm1157, %v1168, %v1170
    %v1172 = vshll.u32 %v1132, 8
    %v1173 = vand.u32 %v1172, 65535
    %v1174 = vshrl.u32 %v1172, 16
    %v1175 = vand.u32 %v1171, 65535
    %v1176 = vshrl.u32 %v1171, 16
    %v1177 = vmul.u32 %v1173, %v1175
    %v1178 = vmul.u32 %v1173, %v1176
    %v1179 = vmul.u32 %v1174, %v1175
    %v1180 = vmul.u32 %v1174, %v1176
    %v1181 = vshll.u32 %v1178, 16
    %v1182 = vshrl.u32 %v1178, 16
    %v1183 = vshll.u32 %v1179, 16
    %v1184 = vshrl.u32 %v1179, 16
    %vm1185 = vc.u32 %v1177, %v1181
    %v1186 = vsel %vm1185, 1, 0
    %v1187 = vadd.s32 %v1177, %v1181
    %v1188 = vadd.s32 %v1180, %v1186
    %vm1189 = vc.u32 %v1187, %v1183
    %v1190 = vsel %vm1189, 1, 0
    %v1191 = vadd.s32 %v1187, %v1183
    %v1192 = vadd.s32 %v1188, %v1190
    %v1193 = vadd.s32 %v1192, %v1182
    %v1194 = vadd.s32 %v1193, %v1184
    %v1195 = vand.u32 %v1172, 65535
    %v1196 = vshrl.u32 %v1172, 16
    %v1197 = vand.u32 %v1167, 65535
    %v1198 = vshrl.u32 %v1167, 16
    %v1199 = vmul.u32 %v1195, %v1197
    %v1200 = vmul.u32 %v1195, %v1198
    %v1201 = vmul.u32 %v1196, %v1197
    %v1202 = vmul.u32 %v1196, %v1198
    %v1203 = vshll.u32 %v1200, 16
    %v1204 = vshrl.u32 %v1200, 16
    %v1205 = vshll.u32 %v1201, 16
    %v1206 = vshrl.u32 %v1201, 16
    %vm1207 = vc.u32 %v1199, %v1203
    %v1208 = vsel %vm1207, 1, 0
    %v1209 = vadd.s32 %v1199, %v1203
    %v1210 = vadd.s32 %v1202, %v1208
    %vm1211 = vc.u32 %v1209, %v1205
    %v1212 = vsel %vm1211, 1, 0
    %v1213 = vadd.s32 %v1209, %v1205
    %v1214 = vadd.s32 %v1210, %v1212
    %v1215 = vadd.s32 %v1214, %v1204
    %v1216 = vadd.s32 %v1215, %v1206
    %v1217 = vmul.u32 %v1172, %v1163
    %v1218 = vadd.s32 %v1194, %v1213
    %vm1219 = vc.u32 %v1194, %v1213
    %v1220 = vadd.s32 %v1216, 1
    %v1221 = vsel %vm1219, %v1220, %v1216
    %v1222 = vadd.s32 %v1217, %v1221
    %v1223 = vadd.s32 %v1222, 536870912
    %v1224 = vshrl.u32 %v1223, 30
    %v1225 = vshll.u32 %v1224, 30
    %v1226 = vsub.s32 %v1222, %v1225
    %vm1227 = vcmp.lt.s32.totalorder %v1226, 0
    %v1228 = vsub.s32 0, %v1226
    %v1229 = vsel %vm1227, %v1228, %v1226
    %v1230 = vclz %v1229
    %v1231 = vsub.s32 %v1230, 2
    %vm1232 = vcmp.gt.s32.totalorder 0, %v1231
    %v1233 = vsel %vm1232, 0, %v1231
    %v1234 = vsub.s32 32, %v1233
    %v1235 = vshll.u32 %v1226, %v1233
    %v1236 = vshrl.u32 %v1218, %v1234
    %v1237 = vor.u32 %v1235, %v1236
    %v1238 = vsub.s32 4294967266, %v1233
    %v1239 = vadd.s32 %v1238, 127
    %v1240 = vshll.u32 %v1239, 23
    %v1241 = vor.u32 4788187, %v1240
    %v1242 = vand.u32 2147483647, %v1241
    %v1244 = vcvt.s32.f32 %v1237
    %v1245 = vmul.f32 %v1244, %v1242
    %v1246 = vxor.u32 %v1245, 2147483648
    %v1247 = vsel %vm1126, %v1246, %v1245
    %v1248 = vsub.s32 4, %v1224
    %v1249 = vsel %vm1126, %v1248, %v1224
    %v1250 = vsel %vm1125, %v38, %v1247
    %v1251 = vsel %vm1125, 0, %v1249
    %v1252 = vmul.f32 %v1250, %v1250
    %v1253 = vmul.f32 %v1252, -0.001358992
    %v1254 = vadd.f32 %v1253, 0.041655596
    %v1255 = vmul.f32 %v1252, %v1254
    %v1256 = vadd.f32 %v1255, -0.4999988
    %v1257 = vmul.f32 %v1252, %v1256
    %v1258 = vadd.f32 1.0, %v1257
    %v1259 = vmul.f32 %v1250, %v1250
    %v1260 = vmul.f32 %v1259, -0.00019511016
    %v1261 = vadd.f32 %v1260, 0.008332121
    %v1262 = vmul.f32 %v1259, %v1261
    %v1263 = vadd.f32 %v1262, -0.16666654
    %v1264 = vmul.f32 %v1259, %v1263
    %v1265 = vadd.f32 %v1264, 1.0
    %v1266 = vmul.f32 %v1265, %v1250
    %vm1267 = vweird.f32 %v38
    %v1268 = vadd.s32 %v1251, 3
    %v1269 = vand.u32 %v1268, 3
    %vm1270 = vcmp.lt.s32.totalorder %v1269, 2
    %vm1271 = vcmp.eq.s32.totalorder %v1269, 0
    %v1272 = vxor.u32 %v1266, 2147483648
    %v1273 = vsel %vm1271, %v1258, %v1272
    %vm1274 = vcmp.eq.s32.totalorder %v1269, 2
    %v1275 = vxor.u32 %v1258, 2147483648
    %v1276 = vsel %vm1274, %v1275, %v1266
    %v1277 = vsel %vm1270, %v1273, %v1276
    %v1278 = vsel %vm1267, nan, %v1277
    %1279 = vst [vmem:[#allocation5] sm:$0xff] %v193
    %1280 = vst [vmem:[#allocation5 + $0x8] sm:$0xff] %v348
    %1281 = vst [vmem:[#allocation5 + $0x10] sm:$0xff] %v503
    %1282 = vst [vmem:[#allocation5 + $0x18] sm:$0xff] %v658
    %1283 = vst [vmem:[#allocation5 + $0x20] sm:$0xff] %v813
    %1284 = vst [vmem:[#allocation5 + $0x28] sm:$0xff] %v968
    %1285 = vst [vmem:[#allocation5 + $0x30] sm:$0xff] %v1123
    %1286 = vst [vmem:[#allocation5 + $0x38] sm:$0xff] %v1278
    // Predicated region
    $region10: #{tpu_custom_call.1} parent=1 // pred_check
      _
    $region11: #{tpu_custom_call.1} parent=1 // pred_check_branch
      %1288 = sbr.rel (0) target = $region13
    $region12: #{tpu_custom_call.1} parent=1 // pred_region
      %1290 = vsyncadd [#allocation4], 0
      %s1292 = sshll.u32 [#allocation5], 4
      %s1293 = int_to_ptr.vmem [resolvable:$true] %s1292
      %s1294 = sshll.u32 %s1, 4
      %s1295 = int_to_ptr.hbm [resolvable:$true] %s1294
      %1297 = dma.vmem_to_hbm [thread:$0]  %s1293, 1024, %s1295, [#allocation4]
    $region13: #{tpu_custom_call.1} parent=1 // pred_fallthru
      _
    // Predicated region
    $region14: #{tpu_custom_call.1} parent=1 // pred_check
      _
    $region15: #{tpu_custom_call.1} parent=1 // pred_check_branch
      %1299 = sbr.rel (0) target = $region17
    $region16: #{tpu_custom_call.1} parent=1 // pred_region
      %1301 = dma.done [#allocation4], 1024
    $region17: #{tpu_custom_call.1} parent=1 // pred_fallthru
      _
    %1302 = vsyncpa [#allocation3], 1
    %1303 = vsyncpa [#allocation4], 1

</llo_original>
